<compile_context>
chip_gen: v7x
topology: tpu7x:2x2x1
jax: 0.10.0
libtpu: 0.0.40
codegen_flags: <defaults>
</compile_context>

<pallas_src>
import functools

import jax
import jax.numpy as jnp
from jax.experimental import pallas as pl
from jax.experimental.pallas import tpu as pltpu


_EPS = 1e-5
_M_TILE_MAX = 256     # rows (N*C) per grid step
_K_TILE_MAX = 4096    # lanes (H*W) per grid step (~2-4 MiB double-buffered)


# ----------------------------- kernel helpers ------------------------------


def _round_up(v, q):
    return ((v + q - 1) // q) * q


def _columns_to_matrix(cols):
    """Assemble a list of (tm, 1) columns into a (tm, len(cols)) matrix.

    Lane-index selects only (VPU); runs once per M tile at finalize, never in
    the per-K-step hot path.
    """
    tm = cols[0].shape[0]
    ncol = len(cols)
    lane = jax.lax.broadcasted_iota(jnp.int32, (tm, ncol), 1)
    out = jnp.zeros((tm, ncol), jnp.float32)
    for idx, col in enumerate(cols):
        out = out + jnp.where(lane == idx, col, 0.0)
    return out


# ------------------------------ Pallas kernel -------------------------------


def _abs_moments_kernel(x_ref, out_ref, shift_ref, s1, s2, s3, s4,
                        *, m, k, tm, tk):
    """out[tm, 4] = |[mean, std, skew, kurt]| per row, streamed over K tiles."""
    # NOTE: program_id / num_programs must stay OUT of pl.when bodies — the
    # interpret-mode lowering has no rule for them inside the nested cond.
    i = pl.program_id(0)
    j = pl.program_id(1)
    last_j = pl.num_programs(1) - 1

    x = x_ref[...].astype(jnp.float32)     # native-dtype tile, upcast on-chip

    # Only materialize edge masks when the shape is genuinely ragged (static).
    valid = None
    if k % tk != 0:
        col = j * tk + jax.lax.broadcasted_iota(jnp.int32, (tm, tk), 1)
        valid = col < k
    if m % tm != 0:
        row = i * tm + jax.lax.broadcasted_iota(jnp.int32, (tm, tk), 0)
        rmask = row < m
        valid = rmask if valid is None else jnp.logical_and(valid, rmask)

    def _mask(v):
        # jnp.where (not multiply) so garbage/Inf/NaN lanes become exact 0.
        return v if valid is None else jnp.where(valid, v, 0.0)

    @pl.when(j == 0)
    def _init():
        # Per-row shift = mean of the first K tile; accumulating powers of
        # (x - shift) avoids catastrophic cancellation of raw power sums.
        cnt0 = float(min(tk, k))
        shift_ref[...] = jnp.sum(_mask(x), axis=1, keepdims=True) * (1.0 / cnt0)
        s1[...] = jnp.zeros_like(s1)
        s2[...] = jnp.zeros_like(s2)
        s3[...] = jnp.zeros_like(s3)
        s4[...] = jnp.zeros_like(s4)

    xs = _mask(x - shift_ref[...])
    xs2 = xs * xs
    s1[...] += jnp.sum(xs, axis=1, keepdims=True)
    s2[...] += jnp.sum(xs2, axis=1, keepdims=True)
    s3[...] += jnp.sum(xs2 * xs, axis=1, keepdims=True)
    s4[...] += jnp.sum(xs2 * xs2, axis=1, keepdims=True)

    @pl.when(j == last_j)
    def _finalize():
        kf = float(k)
        inv_k = 1.0 / kf
        d = s1[...] * inv_k                       # d = mean - shift (small)
        m2 = s2[...] * inv_k                      # moments about the shift
        m3 = s3[...] * inv_k
        m4 = s4[...] * inv_k
        mean = shift_ref[...] + d
        # Unbiased sample variance (torch.var default) + eps; guard H*W == 1.
        var_u = (s2[...] - kf * d * d) * (1.0 / float(max(k - 1, 1)))
        std = jnp.sqrt(jnp.maximum(var_u, 0.0) + _EPS)
        # Population central moments about the mean, from shifted moments.
        d2 = d * d
        c3 = m3 - 3.0 * d * m2 + 2.0 * d * d2
        c4 = m4 - 4.0 * d * m3 + 6.0 * d2 * m2 - 3.0 * d2 * d2
        inv_std = 1.0 / std
        inv_std2 = inv_std * inv_std
        skew = c3 * (inv_std2 * inv_std)
        kurt = c4 * (inv_std2 * inv_std2)
        out_ref[...] = _columns_to_matrix(
            [jnp.abs(mean), jnp.abs(std), jnp.abs(skew), jnp.abs(kurt)])


# ------------------------------ JAX wrappers --------------------------------


def _tiling(m, k):
    """Static tile sizes (tm, tk)."""
    tm = min(_round_up(m, 8), _M_TILE_MAX)
    # Guarantee >= 2 tiles on the "parallel" M axis when possible: v7x shards
    # this axis across its 2 TensorCores; splitting is ~free on v5e/v6e.
    if m > 8 and pl.cdiv(m, tm) < 2:
        tm = _round_up(pl.cdiv(m, 2), 8)
    tk = min(_round_up(k, 128), _K_TILE_MAX)
    return tm, tk


@jax.jit
def compute_abs_moments(x_nchw):
    """abs of (mean, std, skew, kurt) per (n, c) channel -> (N*C, 4) f32."""
    n, c, h, w = x_nchw.shape
    m, k = n * c, h * w
    tm, tk = _tiling(m, k)
    n_m, n_k = pl.cdiv(m, tm), pl.cdiv(k, tk)
    feats = x_nchw.reshape(m, k)        # free reshape; native dtype; no pad
    out = pl.pallas_call(
        functools.partial(_abs_moments_kernel, m=m, k=k, tm=tm, tk=tk),
        out_shape=jax.ShapeDtypeStruct((n_m * tm, 4), jnp.float32),
        grid=(n_m, n_k),
        in_specs=[pl.BlockSpec((tm, tk), lambda i, j: (i, j))],
        out_specs=pl.BlockSpec((tm, 4), lambda i, j: (i, 0)),
        # scratch: shift, S1, S2, S3, S4 (all (tm, 1) f32, persistent over K)
        scratch_shapes=[pltpu.VMEM((tm, 1), jnp.float32)] * 5,
        compiler_params=pltpu.CompilerParams(
            dimension_semantics=("parallel", "arbitrary"),
            vmem_limit_bytes=48 * 1024 * 1024),
    )(feats)
    return out[:m]


@jax.jit
def style_loss_forward(x_nchw, target_moments, weights):
    """Returns (input unchanged, scalar weighted moment-MSE loss)."""
    mom = compute_abs_moments(x_nchw)                       # (N*C, 4)
    mse = jnp.mean((mom - target_moments) ** 2, axis=0)     # per-moment MSE
    loss = jnp.sum(weights * mse)
    return x_nchw, loss


class StyleLossMeanStdSkewKurtosis:
    """JAX/Pallas port of the PyTorch module (loss stored as attribute)."""

    def __init__(self, target):
        n, c, _, _ = target.shape
        tgt = compute_abs_moments(target)                   # (N*C, 4)
        self._target_moments = tgt
        self.target_mean = tgt[:, 0].reshape(n, c, 1, 1)
        self.target_std = tgt[:, 1].reshape(n, c, 1, 1)
        self.target_skewness = tgt[:, 2].reshape(n, c, 1, 1)
        self.target_kurtosis = tgt[:, 3].reshape(n, c, 1, 1)
        # Balancing factors depend only on the target -> precompute once.
        self._weights = jnp.abs(jnp.minimum(1.0 / jnp.mean(tgt, axis=0), 1.0))
        self.loss = jnp.float32(0.0)

    def __call__(self, x):
        out, loss = style_loss_forward(x, self._target_moments, self._weights)
        self.loss = loss
        return out


# --------------------------------- main --------------------------------------


if __name__ == "__main__":
    key = jax.random.PRNGKey(0)
    k_tgt, k_in = jax.random.split(key)

    N, C, H, W = 2, 4, 16, 16  # NCHW, like the PyTorch conv feature maps
    target = jax.random.normal(k_tgt, (N, C, H, W), dtype=jnp.float32)
    x = jax.random.normal(k_in, (N, C, H, W), dtype=jnp.float32)

    module = StyleLossMeanStdSkewKurtosis(target)
    out = module(x)
    out = jax.block_until_ready(out)
    loss = jax.block_until_ready(module.loss)

    # ------------------------ pure-JAX reference ----------------------------
    def ref_abs_moments(t):
        n, c, h, w = t.shape
        f = t.reshape(n * c, h * w).astype(jnp.float32)
        mean = f.mean(axis=1)
        std = jnp.sqrt(f.var(axis=1, ddof=1) + _EPS)
        z = (f - mean[:, None]) / std[:, None]
        skew = (z ** 3).mean(axis=1)
        kurt = (z ** 4).mean(axis=1)
        return jnp.stack(
            [jnp.abs(mean), jnp.abs(std), jnp.abs(skew), jnp.abs(kurt)], axis=1)

    ref_in = ref_abs_moments(x)
    ref_tg = ref_abs_moments(target)
    ref_w = jnp.abs(jnp.minimum(1.0 / jnp.mean(ref_tg, axis=0), 1.0))
    ref_loss = jnp.sum(ref_w * jnp.mean((ref_in - ref_tg) ** 2, axis=0))

    # Kernel-computed moments vs reference.
    got_moments = jax.block_until_ready(compute_abs_moments(x))
    assert got_moments.shape == (N * C, 4)
    assert bool(jnp.allclose(got_moments, ref_in, rtol=2e-3, atol=1e-5))

    # Forward semantics: input passes through unchanged, loss matches.
    assert out.shape == x.shape and bool(jnp.allclose(out, x))
    assert bool(jnp.allclose(loss, ref_loss, rtol=2e-3, atol=1e-6)), (loss, ref_loss)

    print("KERNEL_OK")
</pallas_src>

<mosaic_0001>
module attributes {stable_mosaic.version = 11 : i64} {
  func.func @_abs_moments_kernel(%arg0: i32, %arg1: i32, %arg2: memref<8x256xf32, #tpu.memory_space<vmem>>, %arg3: memref<8x4xf32, #tpu.memory_space<vmem>>, %arg4: memref<8x1xf32, #tpu.memory_space<vmem>>, %arg5: memref<8x1xf32, #tpu.memory_space<vmem>>, %arg6: memref<8x1xf32, #tpu.memory_space<vmem>>, %arg7: memref<8x1xf32, #tpu.memory_space<vmem>>, %arg8: memref<8x1xf32, #tpu.memory_space<vmem>>) attributes {dimension_semantics = [#tpu.dimension_semantics<parallel>, #tpu.dimension_semantics<arbitrary>], iteration_bounds = array<i64: 1, 1>, scalar_prefetch = 0 : i64, scratch_operands = 5 : i64, tpu.core_type = #tpu.core_type<tc>, window_params = [{transform_indices = @transform_0, window_bounds = array<i64: 8, 256>}, {transform_indices = @transform_1, window_bounds = array<i64: 8, 4>}]} {
    %c0 = arith.constant 0 : index
    %c0_0 = arith.constant 0 : index
    %0 = vector.load %arg2[%c0, %c0_0] : memref<8x256xf32, #tpu.memory_space<vmem>>, vector<8x256xf32>
    %c0_i32 = arith.constant 0 : i32
    %1 = arith.cmpi eq, %arg1, %c0_i32 : i32
    %2 = arith.extui %1 : i1 to i32
    %c0_i32_1 = arith.constant 0 : i32
    %3 = arith.cmpi ne, %2, %c0_i32_1 : i32
    scf.if %3 {
      %cst_25 = arith.constant dense<0.000000e+00> : vector<8xf32>
      %33 = vector.multi_reduction <add>, %0, %cst_25 [1] : vector<8x256xf32> to vector<8xf32>
      %34 = vector.shape_cast %33 : vector<8xf32> to vector<8x1xf32>
      %cst_26 = arith.constant 3.906250e-03 : f32
      %35 = vector.broadcast %cst_26 : f32 to vector<8x1xf32>
      %36 = arith.mulf %34, %35 : vector<8x1xf32>
      %c0_27 = arith.constant 0 : index
      %c0_28 = arith.constant 0 : index
      %37 = vector.load %arg4[%c0_27, %c0_28] : memref<8x1xf32, #tpu.memory_space<vmem>>, vector<8x1xf32>
      tpu.vector_store %arg4[%c0_27, %c0_28], %36 {strides = array<i32>} : memref<8x1xf32, #tpu.memory_space<vmem>>, vector<8x1xf32>,
      %cst_29 = arith.constant 0.000000e+00 : f32
      %38 = vector.broadcast %cst_29 : f32 to vector<8x1xf32>
      %c0_30 = arith.constant 0 : index
      %c0_31 = arith.constant 0 : index
      %39 = vector.load %arg5[%c0_30, %c0_31] : memref<8x1xf32, #tpu.memory_space<vmem>>, vector<8x1xf32>
      tpu.vector_store %arg5[%c0_30, %c0_31], %38 {strides = array<i32>} : memref<8x1xf32, #tpu.memory_space<vmem>>, vector<8x1xf32>,
      %cst_32 = arith.constant 0.000000e+00 : f32
      %40 = vector.broadcast %cst_32 : f32 to vector<8x1xf32>
      %c0_33 = arith.constant 0 : index
      %c0_34 = arith.constant 0 : index
      %41 = vector.load %arg6[%c0_33, %c0_34] : memref<8x1xf32, #tpu.memory_space<vmem>>, vector<8x1xf32>
      tpu.vector_store %arg6[%c0_33, %c0_34], %40 {strides = array<i32>} : memref<8x1xf32, #tpu.memory_space<vmem>>, vector<8x1xf32>,
      %cst_35 = arith.constant 0.000000e+00 : f32
      %42 = vector.broadcast %cst_35 : f32 to vector<8x1xf32>
      %c0_36 = arith.constant 0 : index
      %c0_37 = arith.constant 0 : index
      %43 = vector.load %arg7[%c0_36, %c0_37] : memref<8x1xf32, #tpu.memory_space<vmem>>, vector<8x1xf32>
      tpu.vector_store %arg7[%c0_36, %c0_37], %42 {strides = array<i32>} : memref<8x1xf32, #tpu.memory_space<vmem>>, vector<8x1xf32>,
      %cst_38 = arith.constant 0.000000e+00 : f32
      %44 = vector.broadcast %cst_38 : f32 to vector<8x1xf32>
      %c0_39 = arith.constant 0 : index
      %c0_40 = arith.constant 0 : index
      %45 = vector.load %arg8[%c0_39, %c0_40] : memref<8x1xf32, #tpu.memory_space<vmem>>, vector<8x1xf32>
      tpu.vector_store %arg8[%c0_39, %c0_40], %44 {strides = array<i32>} : memref<8x1xf32, #tpu.memory_space<vmem>>, vector<8x1xf32>,
    } else {
    }
    %c0_2 = arith.constant 0 : index
    %c0_3 = arith.constant 0 : index
    %4 = vector.load %arg4[%c0_2, %c0_3] : memref<8x1xf32, #tpu.memory_space<vmem>>, vector<8x1xf32>
    %5 = vector.broadcast %4 : vector<8x1xf32> to vector<8x256xf32>
    %6 = arith.subf %0, %5 : vector<8x256xf32>
    %7 = arith.mulf %6, %6 : vector<8x256xf32>
    %c0_4 = arith.constant 0 : index
    %c0_5 = arith.constant 0 : index
    %8 = vector.load %arg5[%c0_4, %c0_5] : memref<8x1xf32, #tpu.memory_space<vmem>>, vector<8x1xf32>
    %cst = arith.constant dense<0.000000e+00> : vector<8xf32>
    %9 = vector.multi_reduction <add>, %6, %cst [1] : vector<8x256xf32> to vector<8xf32>
    %10 = vector.shape_cast %9 : vector<8xf32> to vector<8x1xf32>
    %11 = arith.addf %8, %10 : vector<8x1xf32>
    %c0_6 = arith.constant 0 : index
    %c0_7 = arith.constant 0 : index
    %12 = vector.load %arg5[%c0_6, %c0_7] : memref<8x1xf32, #tpu.memory_space<vmem>>, vector<8x1xf32>
    tpu.vector_store %arg5[%c0_6, %c0_7], %11 {strides = array<i32>} : memref<8x1xf32, #tpu.memory_space<vmem>>, vector<8x1xf32>,
    %c0_8 = arith.constant 0 : index
    %c0_9 = arith.constant 0 : index
    %13 = vector.load %arg6[%c0_8, %c0_9] : memref<8x1xf32, #tpu.memory_space<vmem>>, vector<8x1xf32>
    %cst_10 = arith.constant dense<0.000000e+00> : vector<8xf32>
    %14 = vector.multi_reduction <add>, %7, %cst_10 [1] : vector<8x256xf32> to vector<8xf32>
    %15 = vector.shape_cast %14 : vector<8xf32> to vector<8x1xf32>
    %16 = arith.addf %13, %15 : vector<8x1xf32>
    %c0_11 = arith.constant 0 : index
    %c0_12 = arith.constant 0 : index
    %17 = vector.load %arg6[%c0_11, %c0_12] : memref<8x1xf32, #tpu.memory_space<vmem>>, vector<8x1xf32>
    tpu.vector_store %arg6[%c0_11, %c0_12], %16 {strides = array<i32>} : memref<8x1xf32, #tpu.memory_space<vmem>>, vector<8x1xf32>,
    %c0_13 = arith.constant 0 : index
    %c0_14 = arith.constant 0 : index
    %18 = vector.load %arg7[%c0_13, %c0_14] : memref<8x1xf32, #tpu.memory_space<vmem>>, vector<8x1xf32>
    %19 = arith.mulf %7, %6 : vector<8x256xf32>
    %cst_15 = arith.constant dense<0.000000e+00> : vector<8xf32>
    %20 = vector.multi_reduction <add>, %19, %cst_15 [1] : vector<8x256xf32> to vector<8xf32>
    %21 = vector.shape_cast %20 : vector<8xf32> to vector<8x1xf32>
    %22 = arith.addf %18, %21 : vector<8x1xf32>
    %c0_16 = arith.constant 0 : index
    %c0_17 = arith.constant 0 : index
    %23 = vector.load %arg7[%c0_16, %c0_17] : memref<8x1xf32, #tpu.memory_space<vmem>>, vector<8x1xf32>
    tpu.vector_store %arg7[%c0_16, %c0_17], %22 {strides = array<i32>} : memref<8x1xf32, #tpu.memory_space<vmem>>, vector<8x1xf32>,
    %c0_18 = arith.constant 0 : index
    %c0_19 = arith.constant 0 : index
    %24 = vector.load %arg8[%c0_18, %c0_19] : memref<8x1xf32, #tpu.memory_space<vmem>>, vector<8x1xf32>
    %25 = arith.mulf %7, %7 : vector<8x256xf32>
    %cst_20 = arith.constant dense<0.000000e+00> : vector<8xf32>
    %26 = vector.multi_reduction <add>, %25, %cst_20 [1] : vector<8x256xf32> to vector<8xf32>
    %27 = vector.shape_cast %26 : vector<8xf32> to vector<8x1xf32>
    %28 = arith.addf %24, %27 : vector<8x1xf32>
    %c0_21 = arith.constant 0 : index
    %c0_22 = arith.constant 0 : index
    %29 = vector.load %arg8[%c0_21, %c0_22] : memref<8x1xf32, #tpu.memory_space<vmem>>, vector<8x1xf32>
    tpu.vector_store %arg8[%c0_21, %c0_22], %28 {strides = array<i32>} : memref<8x1xf32, #tpu.memory_space<vmem>>, vector<8x1xf32>,
    %c0_i32_23 = arith.constant 0 : i32
    %30 = arith.cmpi eq, %arg1, %c0_i32_23 : i32
    %31 = arith.extui %30 : i1 to i32
    %c0_i32_24 = arith.constant 0 : i32
    %32 = arith.cmpi ne, %31, %c0_i32_24 : i32
    scf.if %32 {
      %c0_25 = arith.constant 0 : index
      %c0_26 = arith.constant 0 : index
      %33 = vector.load %arg5[%c0_25, %c0_26] : memref<8x1xf32, #tpu.memory_space<vmem>>, vector<8x1xf32>
      %cst_27 = arith.constant 3.906250e-03 : f32
      %34 = vector.broadcast %cst_27 : f32 to vector<8x1xf32>
      %35 = arith.mulf %33, %34 : vector<8x1xf32>
      %c0_28 = arith.constant 0 : index
      %c0_29 = arith.constant 0 : index
      %36 = vector.load %arg6[%c0_28, %c0_29] : memref<8x1xf32, #tpu.memory_space<vmem>>, vector<8x1xf32>
      %cst_30 = arith.constant 3.906250e-03 : f32
      %37 = vector.broadcast %cst_30 : f32 to vector<8x1xf32>
      %38 = arith.mulf %36, %37 : vector<8x1xf32>
      %c0_31 = arith.constant 0 : index
      %c0_32 = arith.constant 0 : index
      %39 = vector.load %arg7[%c0_31, %c0_32] : memref<8x1xf32, #tpu.memory_space<vmem>>, vector<8x1xf32>
      %cst_33 = arith.constant 3.906250e-03 : f32
      %40 = vector.broadcast %cst_33 : f32 to vector<8x1xf32>
      %41 = arith.mulf %39, %40 : vector<8x1xf32>
      %c0_34 = arith.constant 0 : index
      %c0_35 = arith.constant 0 : index
      %42 = vector.load %arg8[%c0_34, %c0_35] : memref<8x1xf32, #tpu.memory_space<vmem>>, vector<8x1xf32>
      %cst_36 = arith.constant 3.906250e-03 : f32
      %43 = vector.broadcast %cst_36 : f32 to vector<8x1xf32>
      %44 = arith.mulf %42, %43 : vector<8x1xf32>
      %c0_37 = arith.constant 0 : index
      %c0_38 = arith.constant 0 : index
      %45 = vector.load %arg4[%c0_37, %c0_38] : memref<8x1xf32, #tpu.memory_space<vmem>>, vector<8x1xf32>
      %46 = arith.addf %45, %35 : vector<8x1xf32>
      %c0_39 = arith.constant 0 : index
      %c0_40 = arith.constant 0 : index
      %47 = vector.load %arg6[%c0_39, %c0_40] : memref<8x1xf32, #tpu.memory_space<vmem>>, vector<8x1xf32>
      %cst_41 = arith.constant 2.560000e+02 : f32
      %48 = vector.broadcast %cst_41 : f32 to vector<8x1xf32>
      %49 = arith.mulf %48, %35 : vector<8x1xf32>
      %50 = arith.mulf %49, %35 : vector<8x1xf32>
      %51 = arith.subf %47, %50 : vector<8x1xf32>
      %cst_42 = arith.constant 0.00392156886 : f32
      %52 = vector.broadcast %cst_42 : f32 to vector<8x1xf32>
      %53 = arith.mulf %51, %52 : vector<8x1xf32>
      %cst_43 = arith.constant 0.000000e+00 : f32
      %54 = vector.broadcast %cst_43 : f32 to vector<8x1xf32>
      %55 = arith.maximumf %53, %54 : vector<8x1xf32>
      %cst_44 = arith.constant 9.99999974E-6 : f32
      %56 = vector.broadcast %cst_44 : f32 to vector<8x1xf32>
      %57 = arith.addf %55, %56 : vector<8x1xf32>
      %58 = math.sqrt %57 : vector<8x1xf32>
      %59 = arith.mulf %35, %35 : vector<8x1xf32>
      %cst_45 = arith.constant 3.000000e+00 : f32
      %60 = vector.broadcast %cst_45 : f32 to vector<8x1xf32>
      %61 = arith.mulf %60, %35 : vector<8x1xf32>
      %62 = arith.mulf %61, %38 : vector<8x1xf32>
      %63 = arith.subf %41, %62 : vector<8x1xf32>
      %cst_46 = arith.constant 2.000000e+00 : f32
      %64 = vector.broadcast %cst_46 : f32 to vector<8x1xf32>
      %65 = arith.mulf %64, %35 : vector<8x1xf32>
      %66 = arith.mulf %65, %59 : vector<8x1xf32>
      %67 = arith.addf %63, %66 : vector<8x1xf32>
      %cst_47 = arith.constant 4.000000e+00 : f32
      %68 = vector.broadcast %cst_47 : f32 to vector<8x1xf32>
      %69 = arith.mulf %68, %35 : vector<8x1xf32>
      %70 = arith.mulf %69, %41 : vector<8x1xf32>
      %71 = arith.subf %44, %70 : vector<8x1xf32>
      %cst_48 = arith.constant 6.000000e+00 : f32
      %72 = vector.broadcast %cst_48 : f32 to vector<8x1xf32>
      %73 = arith.mulf %72, %59 : vector<8x1xf32>
      %74 = arith.mulf %73, %38 : vector<8x1xf32>
      %75 = arith.addf %71, %74 : vector<8x1xf32>
      %cst_49 = arith.constant 3.000000e+00 : f32
      %76 = vector.broadcast %cst_49 : f32 to vector<8x1xf32>
      %77 = arith.mulf %76, %59 : vector<8x1xf32>
      %78 = arith.mulf %77, %59 : vector<8x1xf32>
      %79 = arith.subf %75, %78 : vector<8x1xf32>
      %cst_50 = arith.constant 1.000000e+00 : f32
      %80 = vector.broadcast %cst_50 : f32 to vector<8x1xf32>
      %81 = arith.divf %80, %58 : vector<8x1xf32>
      %82 = arith.mulf %81, %81 : vector<8x1xf32>
      %83 = arith.mulf %82, %81 : vector<8x1xf32>
      %84 = arith.mulf %67, %83 : vector<8x1xf32>
      %85 = arith.mulf %82, %82 : vector<8x1xf32>
      %86 = arith.mulf %79, %85 : vector<8x1xf32>
      %87 = math.absf %46 : vector<8x1xf32>
      %88 = math.absf %58 : vector<8x1xf32>
      %89 = math.absf %84 : vector<8x1xf32>
      %90 = math.absf %86 : vector<8x1xf32>
      %91 = tpu.iota {dimensions = array<i32: 1>} : vector<8x4xi32>
      %cst_51 = arith.constant 0.000000e+00 : f32
      %92 = vector.broadcast %cst_51 : f32 to vector<8x4xf32>
      %c0_i32_52 = arith.constant 0 : i32
      %93 = vector.broadcast %c0_i32_52 : i32 to vector<8x4xi32>
      %94 = arith.cmpi eq, %91, %93 : vector<8x4xi32>
      %cst_53 = arith.constant 0.000000e+00 : f32
      %95 = vector.shape_cast %87 : vector<8x1xf32> to vector<8x1xf32>
      %96 = vector.broadcast %95 : vector<8x1xf32> to vector<8x4xf32>
      %97 = vector.broadcast %cst_53 : f32 to vector<8x4xf32>
      %98 = arith.select %94, %96, %97 : vector<8x4xi1>, vector<8x4xf32>
      %99 = arith.addf %92, %98 : vector<8x4xf32>
      %c1_i32 = arith.constant 1 : i32
      %100 = vector.broadcast %c1_i32 : i32 to vector<8x4xi32>
      %101 = arith.cmpi eq, %91, %100 : vector<8x4xi32>
      %cst_54 = arith.constant 0.000000e+00 : f32
      %102 = vector.shape_cast %88 : vector<8x1xf32> to vector<8x1xf32>
      %103 = vector.broadcast %102 : vector<8x1xf32> to vector<8x4xf32>
      %104 = vector.broadcast %cst_54 : f32 to vector<8x4xf32>
      %105 = arith.select %101, %103, %104 : vector<8x4xi1>, vector<8x4xf32>
      %106 = arith.addf %99, %105 : vector<8x4xf32>
      %c2_i32 = arith.constant 2 : i32
      %107 = vector.broadcast %c2_i32 : i32 to vector<8x4xi32>
      %108 = arith.cmpi eq, %91, %107 : vector<8x4xi32>
      %cst_55 = arith.constant 0.000000e+00 : f32
      %109 = vector.shape_cast %89 : vector<8x1xf32> to vector<8x1xf32>
      %110 = vector.broadcast %109 : vector<8x1xf32> to vector<8x4xf32>
      %111 = vector.broadcast %cst_55 : f32 to vector<8x4xf32>
      %112 = arith.select %108, %110, %111 : vector<8x4xi1>, vector<8x4xf32>
      %113 = arith.addf %106, %112 : vector<8x4xf32>
      %c3_i32 = arith.constant 3 : i32
      %114 = vector.broadcast %c3_i32 : i32 to vector<8x4xi32>
      %115 = arith.cmpi eq, %91, %114 : vector<8x4xi32>
      %cst_56 = arith.constant 0.000000e+00 : f32
      %116 = vector.shape_cast %90 : vector<8x1xf32> to vector<8x1xf32>
      %117 = vector.broadcast %116 : vector<8x1xf32> to vector<8x4xf32>
      %118 = vector.broadcast %cst_56 : f32 to vector<8x4xf32>
      %119 = arith.select %115, %117, %118 : vector<8x4xi1>, vector<8x4xf32>
      %120 = arith.addf %113, %119 : vector<8x4xf32>
      %c0_57 = arith.constant 0 : index
      %c0_58 = arith.constant 0 : index
      %121 = vector.load %arg3[%c0_57, %c0_58] : memref<8x4xf32, #tpu.memory_space<vmem>>, vector<8x4xf32>
      tpu.vector_store %arg3[%c0_57, %c0_58], %120 {strides = array<i32>} : memref<8x4xf32, #tpu.memory_space<vmem>>, vector<8x4xf32>,
    } else {
    }
    return
  }
  func.func @transform_0(%arg0: i32, %arg1: i32) -> (i32, i32) {
    %c0_i32 = arith.constant 0 : i32
    return %arg0, %arg1 : i32, i32
  }
  func.func @transform_1(%arg0: i32, %arg1: i32) -> (i32, i32) {
    %c0_i32 = arith.constant 0 : i32
    %c0_i32_0 = arith.constant 0 : i32
    return %arg0, %c0_i32 : i32, i32
  }
}

</mosaic_0001>

<llo_original>
// kernel: compute_abs_moments.1
$region0: #{compute_abs_moments.1}
  #allocation0 [shape = 'u32[]', space=smem, size = 0x4, offset = 0x4, fixed_abs, tag = 'smem constant byte address 0x4 - core index']
  #allocation1 [shape = 'u32[144,128]{1,0:T(1,128)}', space=vmem, size = 0x12000, scoped, tag = 'internal scratch']
  #allocation2 [shape = 'f32[8,1]{1,0:T(8,128)}', space=vmem, size = 0x1000, scoped, tag = 'scratch operand']
  #allocation3 [shape = 'f32[8,1]{1,0:T(8,128)}', space=vmem, size = 0x1000, scoped, tag = 'scratch operand']
  #allocation4 [shape = 'f32[8,1]{1,0:T(8,128)}', space=vmem, size = 0x1000, scoped, tag = 'scratch operand']
  #allocation5 [shape = 'f32[8,1]{1,0:T(8,128)}', space=vmem, size = 0x1000, scoped, tag = 'scratch operand']
  #allocation6 [shape = 'f32[8,1]{1,0:T(8,128)}', space=vmem, size = 0x1000, scoped, tag = 'scratch operand']
  %s0 = inlined_call_operand.vmem [shape: f32[8,256], index: 0, kind: input, shape index: {}]
  %s1 = inlined_call_operand.vmem [shape: f32[8,4], index: 1, kind: output, shape index: {}]
  %s2 = sld [smem:[#allocation0]]
  $region22: #{compute_abs_moments.1} parent=0
    _
  %s4 = ssub.s32 1, %s2
  %s5 = scalar_select 0, %s4, %s2
  // Predicated region
  $region2: #{compute_abs_moments.1} parent=0 // pred_check
    _
  $region3: #{compute_abs_moments.1} parent=0 // pred_check_branch
    %7 = sbr.rel (0) target = $region5
  $region4: #{compute_abs_moments.1} parent=0 // pred_region
    _
  $region5: #{compute_abs_moments.1} parent=0 // pred_fallthru
    _
  %v8 = vld [vmem:[%s0] sm:$0xff]
  %v9 = vld [vmem:[%s0 + $0x8] sm:$0xff]
  %p10 = scmp.eq.s32.totalorder 0, 0
  // Predicated region
  $region6: #{compute_abs_moments.1} parent=0 // pred_check
    %p11 = pneg %p10
  $region7: #{compute_abs_moments.1} parent=0 // pred_check_branch
    %13 = sbr.rel (%p11) target = $region9
  $region8: #{compute_abs_moments.1} parent=0 // pred_region
    %v14 = vadd.f32 %v8, %v9
    %15 = vadd.xlane.f32.xlu0 %v14
    %v16 = vpop.xlane.xlu0 %15
    %v17 = vmul.f32 %v16, 0.00390625
    %vm18 = vcmask 7168
    %19 = vst.msk [vmem:[#allocation2] sm:$0xff] %vm18, %v17
    %20 = vst.msk [vmem:[#allocation3] sm:$0xff] %vm18, 0.0
    %21 = vst.msk [vmem:[#allocation4] sm:$0xff] %vm18, 0.0
    %22 = vst.msk [vmem:[#allocation5] sm:$0xff] %vm18, 0.0
    %23 = vst.msk [vmem:[#allocation6] sm:$0xff] %vm18, 0.0
  $region9: #{compute_abs_moments.1} parent=0 // pred_fallthru
    _
  %v24 = vld [vmem:[#allocation2] sm:$0xff]
  %26 = vset.pattern.permute.xlu0 0
  %27 = vperm.xlu0 %26, %v24
  %v28 = vpop.permute.xlu0 %27
  %v30 = vsub.f32 %v8, %v28
  %v31 = vsub.f32 %v9, %v28
  %v32 = vmul.f32 %v30, %v30
  %v33 = vmul.f32 %v31, %v31
  %v34 = vld [vmem:[#allocation3] sm:$0xff]
  %v35 = vadd.f32 %v30, %v31
  %36 = vadd.xlane.f32.xlu0 %v35
  %v37 = vpop.xlane.xlu0 %36
  %v38 = vadd.f32 %v34, %v37
  %vm39 = vcmask 7168
  %40 = vst.msk [vmem:[#allocation3] sm:$0xff] %vm39, %v38
  %v41 = vld [vmem:[#allocation4] sm:$0xff]
  %v42 = vadd.f32 %v32, %v33
  %43 = vadd.xlane.f32.xlu0 %v42
  %v44 = vpop.xlane.xlu0 %43
  %v45 = vadd.f32 %v41, %v44
  %46 = vst.msk [vmem:[#allocation4] sm:$0xff] %vm39, %v45
  %v47 = vld [vmem:[#allocation5] sm:$0xff]
  %v48 = vmul.f32 %v32, %v30
  %v49 = vmul.f32 %v33, %v31
  %v50 = vadd.f32 %v48, %v49
  %51 = vadd.xlane.f32.xlu0 %v50
  %v52 = vpop.xlane.xlu0 %51
  %v53 = vadd.f32 %v47, %v52
  %54 = vst.msk [vmem:[#allocation5] sm:$0xff] %vm39, %v53
  %v55 = vld [vmem:[#allocation6] sm:$0xff]
  %v56 = vmul.f32 %v32, %v32
  %v57 = vmul.f32 %v33, %v33
  %v58 = vadd.f32 %v56, %v57
  %59 = vadd.xlane.f32.xlu0 %v58
  %v60 = vpop.xlane.xlu0 %59
  %v61 = vadd.f32 %v55, %v60
  %62 = vst.msk [vmem:[#allocation6] sm:$0xff] %vm39, %v61
  // Predicated region
  $region10: #{compute_abs_moments.1} parent=0 // pred_check
    %p63 = pneg %p10
  $region11: #{compute_abs_moments.1} parent=0 // pred_check_branch
    %65 = sbr.rel (%p63) target = $region13
  $region12: #{compute_abs_moments.1} parent=0 // pred_region
    %v66 = vld [vmem:[#allocation3] sm:$0xff]
    %v67 = vmul.f32 %v66, 0.00390625
    %v68 = vld [vmem:[#allocation4] sm:$0xff]
    %v69 = vmul.f32 %v68, 0.00390625
    %v70 = vld [vmem:[#allocation5] sm:$0xff]
    %v71 = vmul.f32 %v70, 0.00390625
    %v72 = vld [vmem:[#allocation6] sm:$0xff]
    %v73 = vmul.f32 %v72, 0.00390625
    %v74 = vld [vmem:[#allocation2] sm:$0xff]
    %v75 = vadd.f32 %v74, %v67
    %v76 = vmul.f32 %v67, 256.0
    %v77 = vmul.f32 %v76, %v67
    %v78 = vsub.f32 %v68, %v77
    %v79 = vmul.f32 %v78, 0.003921569
    %v80 = vmax.f32 %v79, 0.0
    %v81 = vadd.f32 %v80, 1e-05
    %v82 = vrsqrt.pop %v81
    %v83 = vmul.f32 %v81, %v82
    %vm84 = vcmp.eq.f32.partialorder %v81, inf
    %v85 = vsel %vm84, %v81, %v83
    %vm86 = vcmp.eq.f32.partialorder %v81, 0.0
    %v87 = vand.u32 %v81, 2147483648
    %v88 = vsel %vm86, %v87, %v85
    %v89 = vmul.f32 %v67, %v67
    %v90 = vmul.f32 %v67, 3.0
    %v91 = vmul.f32 %v90, %v69
    %v92 = vsub.f32 %v71, %v91
    %v93 = vmul.f32 %v67, 2.0
    %v94 = vmul.f32 %v93, %v89
    %v95 = vadd.f32 %v92, %v94
    %v96 = vmul.f32 %v67, 4.0
    %v97 = vmul.f32 %v96, %v71
    %v98 = vsub.f32 %v73, %v97
    %v99 = vmul.f32 %v89, 6.0
    %v100 = vmul.f32 %v99, %v69
    %v101 = vadd.f32 %v98, %v100
    %v102 = vmul.f32 %v89, 3.0
    %v103 = vmul.f32 %v102, %v89
    %v104 = vsub.f32 %v101, %v103
    %v105 = vrcp.pop %v88
    %v106 = vmul.f32 1.0, %v105
    %v107 = vmul.f32 %v106, %v106
    %v108 = vmul.f32 %v107, %v106
    %v109 = vmul.f32 %v95, %v108
    %v110 = vmul.f32 %v107, %v107
    %v111 = vmul.f32 %v104, %v110
    %v112 = vand.u32 2147483647, %v75
    %v113 = vand.u32 2147483647, %v88
    %v114 = vand.u32 2147483647, %v109
    %v115 = vand.u32 2147483647, %v111
    %v116 = vlaneseq
    %v117 = vand.u32 %v116, 127
    %vm118 = vcmp.eq.s32.totalorder %v117, 0
    %120 = vset.pattern.permute.xlu0 0
    %121 = vperm.xlu0 %120, %v112
    %v122 = vpop.permute.xlu0 %121
    %v124 = vsel %vm118, %v122, 0.0
    %v125 = vadd.f32 %v124, 0.0
    %vm126 = vcmp.eq.s32.totalorder %v117, 1
    %128 = vset.pattern.permute.xlu0 0
    %129 = vperm.xlu0 %128, %v113
    %v130 = vpop.permute.xlu0 %129
    %v132 = vsel %vm126, %v130, 0.0
    %v133 = vadd.f32 %v125, %v132
    %vm134 = vcmp.eq.s32.totalorder %v117, 2
    %136 = vset.pattern.permute.xlu0 0
    %137 = vperm.xlu0 %136, %v114
    %v138 = vpop.permute.xlu0 %137
    %v140 = vsel %vm134, %v138, 0.0
    %v141 = vadd.f32 %v133, %v140
    %vm142 = vcmp.eq.s32.totalorder %v117, 3
    %144 = vset.pattern.permute.xlu0 0
    %145 = vperm.xlu0 %144, %v115
    %v146 = vpop.permute.xlu0 %145
    %v148 = vsel %vm142, %v146, 0.0
    %v149 = vadd.f32 %v141, %v148
    %vm150 = vcmask 31744
    %151 = vst.msk [vmem:[%s1] sm:$0xff] %vm150, %v149
  $region13: #{compute_abs_moments.1} parent=0 // pred_fallthru
    _
  // Predicated region
  $region14: #{compute_abs_moments.1} parent=0 // pred_check
    _
  $region15: #{compute_abs_moments.1} parent=0 // pred_check_branch
    %153 = sbr.rel (0) target = $region17
  $region16: #{compute_abs_moments.1} parent=0 // pred_region
    _
  $region17: #{compute_abs_moments.1} parent=0 // pred_fallthru
    _
  // Predicated region
  $region18: #{compute_abs_moments.1} parent=0 // pred_check
    _
  $region19: #{compute_abs_moments.1} parent=0 // pred_check_branch
    %155 = sbr.rel (0) target = $region21
  $region20: #{compute_abs_moments.1} parent=0 // pred_region
    _
  $region21: #{compute_abs_moments.1} parent=0 // pred_fallthru
    _

</llo_original>
